<compile_context>
chip_gen: v7x
topology: tpu7x:2x2x1
jax: 0.10.0
libtpu: 0.0.40
codegen_flags: <defaults>
</compile_context>

<pallas_src>
import functools

import jax
import jax.numpy as jnp
from jax import lax
from jax.experimental import pallas as pl
from jax.experimental.pallas import tpu as pltpu


_VMEM_WORKING_BUDGET = 36 * 1024 * 1024   # 3 streamed arrays x 2 buffers, all chips
_VMEM_LIMIT_BYTES = 64 * 1024 * 1024      # raise scoped VMEM (v5e default is 16 MiB)
_MAX_TILE_ROWS = 1024


def _row_multiple(dtype):
    """Rows per packed sublane group for this dtype (8 f32 / 16 bf16 / 32 int8)."""
    itemsize = jnp.dtype(dtype).itemsize
    return {4: 8, 2: 16, 1: 32}.get(itemsize, 8)


def _pick_tile_rows(rows, hidden, dtype):
    """Largest dtype-aligned row tile whose double-buffered working set fits VMEM."""
    mult = _row_multiple(dtype)
    itemsize = jnp.dtype(dtype).itemsize
    bytes_per_row = 3 * 2 * hidden * itemsize          # x, sublayer_out, out; 2 buffers
    t = _VMEM_WORKING_BUDGET // max(bytes_per_row, 1)
    t = min(t, _MAX_TILE_ROWS)
    t = max(mult, (t // mult) * mult)                   # whole packed vregs, no sublane pad
    rows_padded_to_mult = ((rows + mult - 1) // mult) * mult
    t = min(t, rows_padded_to_mult)                     # don't exceed the (padded) row count
    return max(t, mult)


def _sublayer_connection_kernel(x_ref, s_ref, gb_ref, o_ref, *, eps):
    # Residual add, compute in f32.
    y = (x_ref[...] + s_ref[...]).astype(jnp.float32)             # (tile_rows, H)
    # LayerNorm over last dim (biased variance, matching torch.nn.LayerNorm).
    mean = jnp.mean(y, axis=-1, keepdims=True)
    centered = y - mean
    var = jnp.mean(centered * centered, axis=-1, keepdims=True)
    norm = centered * lax.rsqrt(var + eps)
    gamma = gb_ref[0:1, :].astype(jnp.float32)                    # broadcast over rows
    beta = gb_ref[1:2, :].astype(jnp.float32)
    out = norm * gamma + beta
    # Dropout in eval mode is identity.
    o_ref[...] = out.astype(o_ref.dtype)


@functools.partial(jax.jit, static_argnames=("eps", "tile_rows"))
def sublayer_connection(x, sublayer_out, gamma, beta, *, eps=1e-6, tile_rows=None):
    """x, sublayer_out: (B, S, H); gamma, beta: (H,). Returns (B, S, H)."""
    B, S, H = x.shape
    rows = B * S

    if tile_rows is None:
        tile_rows = _pick_tile_rows(rows, H, x.dtype)

    rows_padded = ((rows + tile_rows - 1) // tile_rows) * tile_rows
    pad = rows_padded - rows

    x2 = x.reshape(rows, H)
    s2 = sublayer_out.reshape(rows, H)
    if pad:
        x2 = jnp.pad(x2, ((0, pad), (0, 0)))
        s2 = jnp.pad(s2, ((0, pad), (0, 0)))
    gb = jnp.stack([gamma, beta])                                  # (2, H) resident constants

    kernel = functools.partial(_sublayer_connection_kernel, eps=eps)

    out2 = pl.pallas_call(
        kernel,
        out_shape=jax.ShapeDtypeStruct((rows_padded, H), x.dtype),
        grid_spec=pl.GridSpec(
            grid=(rows_padded // tile_rows,),
            in_specs=[
                pl.BlockSpec((tile_rows, H), lambda i: (i, 0)),
                pl.BlockSpec((tile_rows, H), lambda i: (i, 0)),
                pl.BlockSpec((2, H), lambda i: (0, 0)),
            ],
            out_specs=pl.BlockSpec((tile_rows, H), lambda i: (i, 0)),
        ),
        compiler_params=pltpu.CompilerParams(
            dimension_semantics=("parallel",),
            vmem_limit_bytes=_VMEM_LIMIT_BYTES,
        ),
        # x2 is consumed by this op; reuse its HBM buffer for the output.
        input_output_aliases={0: 0},
    )(x2, s2, gb)

    if pad:
        out2 = out2[:rows]
    return out2.reshape(B, S, H)


def reference(x, sublayer_out, gamma, beta, eps=1e-6):
    y = (x + sublayer_out).astype(jnp.float32)
    mean = jnp.mean(y, axis=-1, keepdims=True)
    var = jnp.mean((y - mean) ** 2, axis=-1, keepdims=True)
    norm = (y - mean) / jnp.sqrt(var + eps)
    return (norm * gamma + beta).astype(x.dtype)


if __name__ == "__main__":
    B, S, H = 2, 8, 32
    key = jax.random.PRNGKey(0)
    kx, kw = jax.random.split(key)

    x = jax.random.normal(kx, (B, S, H), dtype=jnp.float32)

    # Deterministic parameters (LayerNorm init: gamma=1, beta=0)
    gamma = jnp.ones((H,), dtype=jnp.float32)
    beta = jnp.zeros((H,), dtype=jnp.float32)

    # A simple deterministic "sublayer": a linear projection (plain-JAX glue).
    w = jax.random.normal(kw, (H, H), dtype=jnp.float32) * 0.02
    sublayer_out = jnp.einsum("bsh,hk->bsk", x, w)

    ref = reference(x, sublayer_out, gamma, beta)

    out = sublayer_connection(x, sublayer_out, gamma, beta)
    out = jax.block_until_ready(out)

    assert out.shape == (B, S, H)
    assert jnp.allclose(out, ref, atol=1e-5, rtol=1e-5), "mismatch vs reference"

    print("KERNEL_OK")
</pallas_src>

<mosaic_0001>
module attributes {stable_mosaic.version = 11 : i64} {
  func.func @_sublayer_connection_kernel(%arg0: i32, %arg1: memref<16x32xf32, #tpu.memory_space<vmem>>, %arg2: memref<16x32xf32, #tpu.memory_space<vmem>>, %arg3: memref<2x32xf32, #tpu.memory_space<vmem>>, %arg4: memref<16x32xf32, #tpu.memory_space<vmem>>) attributes {dimension_semantics = [#tpu.dimension_semantics<parallel>], iteration_bounds = array<i64: 1>, scalar_prefetch = 0 : i64, scratch_operands = 0 : i64, tpu.core_type = #tpu.core_type<tc>, window_params = [{transform_indices = @transform_0, window_bounds = array<i64: 16, 32>}, {transform_indices = @transform_1, window_bounds = array<i64: 16, 32>}, {pipeline_mode = #tpu.pipeline_mode<synchronous>, transform_indices = @transform_2, window_bounds = array<i64: 2, 32>}, {transform_indices = @transform_3, window_bounds = array<i64: 16, 32>}]} {
    %c0 = arith.constant 0 : index
    %c0_0 = arith.constant 0 : index
    %0 = vector.load %arg1[%c0, %c0_0] : memref<16x32xf32, #tpu.memory_space<vmem>>, vector<16x32xf32>
    %c0_1 = arith.constant 0 : index
    %c0_2 = arith.constant 0 : index
    %1 = vector.load %arg2[%c0_1, %c0_2] : memref<16x32xf32, #tpu.memory_space<vmem>>, vector<16x32xf32>
    %2 = arith.addf %0, %1 : vector<16x32xf32>
    %cst = arith.constant dense<0.000000e+00> : vector<16xf32>
    %3 = vector.multi_reduction <add>, %2, %cst [1] : vector<16x32xf32> to vector<16xf32>
    %4 = vector.shape_cast %3 : vector<16xf32> to vector<16x1xf32>
    %cst_3 = arith.constant 3.200000e+01 : f32
    %5 = vector.broadcast %cst_3 : f32 to vector<16x1xf32>
    %6 = arith.divf %4, %5 : vector<16x1xf32>
    %7 = vector.broadcast %6 : vector<16x1xf32> to vector<16x32xf32>
    %8 = arith.subf %2, %7 : vector<16x32xf32>
    %9 = arith.mulf %8, %8 : vector<16x32xf32>
    %cst_4 = arith.constant dense<0.000000e+00> : vector<16xf32>
    %10 = vector.multi_reduction <add>, %9, %cst_4 [1] : vector<16x32xf32> to vector<16xf32>
    %11 = vector.shape_cast %10 : vector<16xf32> to vector<16x1xf32>
    %cst_5 = arith.constant 3.200000e+01 : f32
    %12 = vector.broadcast %cst_5 : f32 to vector<16x1xf32>
    %13 = arith.divf %11, %12 : vector<16x1xf32>
    %cst_6 = arith.constant 9.99999997E-7 : f32
    %14 = vector.broadcast %cst_6 : f32 to vector<16x1xf32>
    %15 = arith.addf %13, %14 : vector<16x1xf32>
    %16 = math.rsqrt %15 : vector<16x1xf32>
    %17 = vector.broadcast %16 : vector<16x1xf32> to vector<16x32xf32>
    %18 = arith.mulf %8, %17 : vector<16x32xf32>
    %c0_7 = arith.constant 0 : index
    %c0_8 = arith.constant 0 : index
    %19 = vector.load %arg3[%c0_7, %c0_8] : memref<2x32xf32, #tpu.memory_space<vmem>>, vector<1x32xf32>
    %c1 = arith.constant 1 : index
    %c0_9 = arith.constant 0 : index
    %20 = vector.load %arg3[%c1, %c0_9] : memref<2x32xf32, #tpu.memory_space<vmem>>, vector<1x32xf32>
    %21 = vector.broadcast %19 : vector<1x32xf32> to vector<16x32xf32>
    %22 = arith.mulf %18, %21 : vector<16x32xf32>
    %23 = vector.broadcast %20 : vector<1x32xf32> to vector<16x32xf32>
    %24 = arith.addf %22, %23 : vector<16x32xf32>
    %c0_10 = arith.constant 0 : index
    %c0_11 = arith.constant 0 : index
    %25 = vector.load %arg4[%c0_10, %c0_11] : memref<16x32xf32, #tpu.memory_space<vmem>>, vector<16x32xf32>
    tpu.vector_store %arg4[%c0_10, %c0_11], %24 {strides = array<i32>} : memref<16x32xf32, #tpu.memory_space<vmem>>, vector<16x32xf32>,
    return
  }
  func.func @transform_0(%arg0: i32) -> (i32, i32) {
    %c0_i32 = arith.constant 0 : i32
    %c0_i32_0 = arith.constant 0 : i32
    return %arg0, %c0_i32 : i32, i32
  }
  func.func @transform_1(%arg0: i32) -> (i32, i32) {
    %c0_i32 = arith.constant 0 : i32
    %c0_i32_0 = arith.constant 0 : i32
    return %arg0, %c0_i32 : i32, i32
  }
  func.func @transform_2(%arg0: i32) -> (i32, i32) {
    %c0_i32 = arith.constant 0 : i32
    %c0_i32_0 = arith.constant 0 : i32
    %c0_i32_1 = arith.constant 0 : i32
    return %c0_i32, %c0_i32_0 : i32, i32
  }
  func.func @transform_3(%arg0: i32) -> (i32, i32) {
    %c0_i32 = arith.constant 0 : i32
    %c0_i32_0 = arith.constant 0 : i32
    return %arg0, %c0_i32 : i32, i32
  }
}

</mosaic_0001>

<llo_original>
// kernel: sublayer_connection.1
$region0: #{sublayer_connection.1}
  #allocation0 [shape = 'u32[]', space=smem, size = 0x4, offset = 0x4, fixed_abs, tag = 'smem constant byte address 0x4 - core index']
  #allocation1 [shape = 'u32[144,128]{1,0:T(1,128)}', space=vmem, size = 0x12000, scoped, tag = 'internal scratch']
  %s0 = inlined_call_operand.hbm [shape: f32[16,32], index: 0, kind: input, shape index: {}, may-alias: {0,3}]
  %s1 = inlined_call_operand.hbm [shape: f32[16,32], index: 1, kind: input, shape index: {}]
  %s2 = inlined_call_operand.hbm [shape: f32[2,32], index: 2, kind: input, shape index: {}]
  %s3 = inlined_call_operand.hbm [shape: f32[16,32], index: 3, kind: output, shape index: {}, may-alias: {0,3}]
  %s4 = sld [smem:[#allocation0]]
  $region34: #{sublayer_connection.1} parent=0
    _
  %s6 = ssub.s32 1, %s4
  %s7 = scalar_select 0, %s6, %s4
  $region1: #{sublayer_connection.1} parent=0
    #allocation2 [shape = 'u8[8192]{0}', space=vmem, size = 0x2000, scoped, tag = 'input window, operand 0, single buffered']
    #allocation3 [shape = 's32[1]{0}', space=sflag, size = 0x4, scoped, tag = 'scoped memory for sublayer_connection.1']
    #allocation4 [shape = 's32[1]{0}', space=sflag, size = 0x4, scoped, tag = 'scoped memory for sublayer_connection.1']
    #allocation5 [shape = 'u8[8192]{0}', space=vmem, size = 0x2000, scoped, tag = 'input window, operand 1, single buffered']
    #allocation6 [shape = 's32[1]{0}', space=sflag, size = 0x4, scoped, tag = 'scoped memory for sublayer_connection.1']
    #allocation7 [shape = 'u8[1024]{0}', space=vmem, size = 0x400, scoped, tag = 'input window, operand 2, single buffered']
    #allocation8 [shape = 'u8[8192]{0}', space=vmem, size = 0x2000, scoped, tag = 'output window, operand 0, single buffered']
    %8 = vsyncpa [#allocation3], 0
    %9 = vsyncpa [#allocation6], 0
    %10 = vsyncpa [#allocation4], 0
    // Predicated region
    $region2: #{sublayer_connection.1} parent=1 // pred_check
      _
    $region3: #{sublayer_connection.1} parent=1 // pred_check_branch
      %12 = sbr.rel (0) target = $region5
    $region4: #{sublayer_connection.1} parent=1 // pred_region
      %s14 = ssub.s32 256, 256
      %15 = vsyncadd [#allocation3], %s14
      %s16 = sshll.u32 [#allocation2], 4
      %s17 = int_to_ptr.vmem [resolvable:$true] %s16
      %22 = dma.hbm_to_vmem [thread:$0]  %s0, 256, %s17, [#allocation3], 128, 128, 8
    $region5: #{sublayer_connection.1} parent=1 // pred_fallthru
      _
    // Predicated region
    $region6: #{sublayer_connection.1} parent=1 // pred_check
      _
    $region7: #{sublayer_connection.1} parent=1 // pred_check_branch
      %24 = sbr.rel (0) target = $region9
    $region8: #{sublayer_connection.1} parent=1 // pred_region
      %s26 = ssub.s32 256, 256
      %27 = vsyncadd [#allocation6], %s26
      %s28 = sshll.u32 [#allocation5], 4
      %s29 = int_to_ptr.vmem [resolvable:$true] %s28
      %34 = dma.hbm_to_vmem [thread:$0]  %s1, 256, %s29, [#allocation6], 128, 128, 8
    $region9: #{sublayer_connection.1} parent=1 // pred_fallthru
      _
    // Predicated region
    $region10: #{sublayer_connection.1} parent=1 // pred_check
      _
    $region11: #{sublayer_connection.1} parent=1 // pred_check_branch
      %36 = sbr.rel (0) target = $region13
    $region12: #{sublayer_connection.1} parent=1 // pred_region
      %s38 = ssub.s32 32, 32
      %39 = vsyncadd [#allocation6], %s38
      %s41 = sshll.u32 [#allocation7], 4
      %s42 = int_to_ptr.vmem [resolvable:$true] %s41
      %44 = dma.hbm_to_vmem [thread:$0]  %s2, 32, %s42, [#allocation6]
    $region13: #{sublayer_connection.1} parent=1 // pred_fallthru
      _
    // Predicated region
    $region14: #{sublayer_connection.1} parent=1 // pred_check
      _
    $region15: #{sublayer_connection.1} parent=1 // pred_check_branch
      %46 = sbr.rel (0) target = $region17
    $region16: #{sublayer_connection.1} parent=1 // pred_region
      %47 = dma.done [#allocation3], 256
    $region17: #{sublayer_connection.1} parent=1 // pred_fallthru
      _
    // Predicated region
    $region18: #{sublayer_connection.1} parent=1 // pred_check
      _
    $region19: #{sublayer_connection.1} parent=1 // pred_check_branch
      %49 = sbr.rel (0) target = $region21
    $region20: #{sublayer_connection.1} parent=1 // pred_region
      %50 = dma.done [#allocation6], 256
    $region21: #{sublayer_connection.1} parent=1 // pred_fallthru
      _
    // Predicated region
    $region22: #{sublayer_connection.1} parent=1 // pred_check
      _
    $region23: #{sublayer_connection.1} parent=1 // pred_check_branch
      %52 = sbr.rel (0) target = $region25
    $region24: #{sublayer_connection.1} parent=1 // pred_region
      %53 = dma.done [#allocation6], 32
    $region25: #{sublayer_connection.1} parent=1 // pred_fallthru
      _
    %v54 = vld [vmem:[#allocation2] sm:$0xff]
    %v55 = vld [vmem:[#allocation2 + $0x8] sm:$0xff]
    %v56 = vld [vmem:[#allocation5] sm:$0xff]
    %v57 = vld [vmem:[#allocation5 + $0x8] sm:$0xff]
    %v58 = vadd.f32 %v54, %v56
    %v59 = vadd.f32 %v55, %v57
    %vm60 = vcmask 261120
    %v61 = vsel %vm60, %v58, 0.0
    %62 = vadd.xlane.f32.xlu0 %v61
    %v63 = vpop.xlane.xlu0 %62
    %v64 = vsel %vm60, %v59, 0.0
    %65 = vadd.xlane.f32.xlu0 %v64
    %v66 = vpop.xlane.xlu0 %65
    %v67 = vrcp.pop 32.0
    %v68 = vmul.f32 %v63, %v67
    %v69 = vmul.f32 %v66, %v67
    %v70 = vsub.f32 %v58, %v68
    %v71 = vsub.f32 %v59, %v69
    %v72 = vmul.f32 %v70, %v70
    %v73 = vmul.f32 %v71, %v71
    %v74 = vsel %vm60, %v72, 0.0
    %75 = vadd.xlane.f32.xlu0 %v74
    %v76 = vpop.xlane.xlu0 %75
    %v77 = vsel %vm60, %v73, 0.0
    %78 = vadd.xlane.f32.xlu0 %v77
    %v79 = vpop.xlane.xlu0 %78
    %v80 = vmul.f32 %v76, %v67
    %v81 = vmul.f32 %v79, %v67
    %v82 = vadd.f32 %v80, 1e-06
    %v83 = vadd.f32 %v81, 1e-06
    %v84 = vrsqrt.pop %v82
    %v85 = vrsqrt.pop %v83
    %v86 = vmul.f32 %v70, %v84
    %v87 = vmul.f32 %v71, %v85
    %v88 = vld [vmem:[#allocation7] sm:$0x1]
    %v89 = vld [vmem:[#allocation7 + $0x1] sm:$0x1]
    %v90 = vlaneseq
    %v91 = vshrl.u32 %v90, 7
    %v92 = vsub.s32 0, %v91
    %v93 = vrot.slane %v88, %v92
    %v94 = vmul.f32 %v86, %v93
    %v95 = vmul.f32 %v87, %v93
    %v96 = vlaneseq
    %v97 = vshrl.u32 %v96, 7
    %v98 = vsub.s32 0, %v97
    %v99 = vrot.slane %v89, %v98
    %v100 = vadd.f32 %v94, %v99
    %v101 = vadd.f32 %v95, %v99
    %102 = vst.msk [vmem:[#allocation8] sm:$0xff] %vm60, %v100
    %103 = vst.msk [vmem:[#allocation8 + $0x8] sm:$0xff] %vm60, %v101
    // Predicated region
    $region26: #{sublayer_connection.1} parent=1 // pred_check
      _
    $region27: #{sublayer_connection.1} parent=1 // pred_check_branch
      %105 = sbr.rel (0) target = $region29
    $region28: #{sublayer_connection.1} parent=1 // pred_region
      %s107 = ssub.s32 256, 256
      %108 = vsyncadd [#allocation4], %s107
      %s109 = sshll.u32 [#allocation8], 4
      %s110 = int_to_ptr.vmem [resolvable:$true] %s109
      %115 = dma.vmem_to_hbm [thread:$0]  %s110, 256, %s3, [#allocation4], 128, 128, 8
    $region29: #{sublayer_connection.1} parent=1 // pred_fallthru
      _
    // Predicated region
    $region30: #{sublayer_connection.1} parent=1 // pred_check
      _
    $region31: #{sublayer_connection.1} parent=1 // pred_check_branch
      %117 = sbr.rel (0) target = $region33
    $region32: #{sublayer_connection.1} parent=1 // pred_region
      %118 = dma.done [#allocation4], 256
    $region33: #{sublayer_connection.1} parent=1 // pred_fallthru
      _
    %119 = vsyncpa [#allocation3], 1
    %120 = vsyncpa [#allocation6], 1
    %121 = vsyncpa [#allocation4], 1

</llo_original>
